<compile_context>
chip_gen: v7x
topology: tpu7x:2x2x1
jax: 0.10.0
libtpu: 0.0.40
codegen_flags: <defaults>
</compile_context>

<pallas_src>
import functools

import jax
import jax.numpy as jnp
from jax.experimental import pallas as pl
from jax.experimental.pallas import tpu as pltpu


def _round_up(n, m):
    return ((n + m - 1) // m) * m


def value_network_kernel(x_ref, w1a_ref, w2t_ref, b2_ref, o_ref):
    # x_ref   : (F+1, TB)  [features ; ones-row] x batch-tile (batch on lanes)
    # w1a_ref : (H, F+1)   [w1.T | b1]  (resident, layer-1 weights with bias folded in)
    # w2t_ref : (1, H)     layer-2 weights, transposed (resident)
    # b2_ref  : (1, 1)     layer-2 bias (SMEM scalar)
    # o_ref   : (1, TB)    output tile (batch on lanes)

    # Layer 1 + bias on the (otherwise idle) MXU; K=F+1 pads to 8 but that's free.
    h = jnp.dot(w1a_ref[...], x_ref[...], preferred_element_type=jnp.float32)  # (H, TB)
    # Only VPU work left in the kernel: the ReLU.
    h = jnp.maximum(h, 0.0)

    # Layer 2: (1, H) @ (H, TB) -> full-K MXU matmul, lane-dense result.
    out = jnp.dot(w2t_ref[...], h, preferred_element_type=jnp.float32)          # (1, TB)
    o_ref[...] = (out + b2_ref[0, 0]).astype(o_ref.dtype)


@functools.partial(jax.jit, static_argnames=("block_b",))
def value_network(x, w1, b1, w2, b2, block_b=16384):
    """Forward pass matching torch: relu(x @ w1 + b1) @ w2 + b2.

    x: (B, 4), w1: (4, H), b1: (1, H) or (H,), w2: (H, 1), b2: (1, 1) -> (B, 1).
    block_b caps the batch tile (lane axis); large tiles amortize per-step overhead.
    """
    B, F = x.shape
    H = w1.shape[1]

    # Pad batch only to the 128-lane granule; tile cap is a multiple of 128.
    B_pad = _round_up(max(B, 1), 128)
    tb_cap = max(128, (int(block_b) // 128) * 128)
    TB = min(tb_cap, B_pad)

    # Layout plumbing (wrapper side): batch onto lanes, fold b1 into w1 via a ones row.
    # TODO(synk): if the caller can supply x already as (4, B) this transpose/concat
    # copy (one extra HBM read+write of x) disappears entirely.
    x_aug = jnp.concatenate([x.T, jnp.ones((1, B), x.dtype)], axis=0)   # (F+1, B)
    if B_pad != B:
        x_aug = jnp.pad(x_aug, ((0, 0), (0, B_pad - B)))                # (F+1, B_pad)
    w1_aug = jnp.concatenate([w1.T, b1.reshape(H, 1)], axis=1)          # (H, F+1)
    w2_t = w2.reshape(H, 1).T                                           # (1, H)
    b2_s = b2.reshape(1, 1)                                             # (1, 1) scalar

    grid = (pl.cdiv(B_pad, TB),)   # last block may be ragged; Pallas masks the write
    out_t = pl.pallas_call(
        value_network_kernel,
        out_shape=jax.ShapeDtypeStruct((1, B_pad), jnp.float32),
        grid=grid,
        in_specs=[
            pl.BlockSpec((F + 1, TB), lambda i: (0, i)),          # stream x over batch
            pl.BlockSpec((H, F + 1), lambda i: (0, 0)),           # weights stay resident
            pl.BlockSpec((1, H), lambda i: (0, 0)),
            pl.BlockSpec(memory_space=pltpu.MemorySpace.SMEM),    # b2 scalar in SMEM
        ],
        out_specs=pl.BlockSpec((1, TB), lambda i: (0, i)),
        compiler_params=pltpu.CompilerParams(
            dimension_semantics=("parallel",),        # pipelined; shards across v7x's 2 TCs
            vmem_limit_bytes=48 * 1024 * 1024,        # explicit: > scoped defaults, < v7x 64 MiB
        ),
    )(x_aug, w1_aug, w2_t, b2_s)

    return out_t[0, :B].reshape(B, 1)


def init_params(key, num_hidden=128):
    # Mirrors torch.nn.Linear default init: U(-1/sqrt(fan_in), 1/sqrt(fan_in)).
    k1, k2, k3, k4 = jax.random.split(key, 4)
    bound1 = 1.0 / jnp.sqrt(4.0)
    w1 = jax.random.uniform(k1, (4, num_hidden), jnp.float32, -bound1, bound1)
    b1 = jax.random.uniform(k2, (1, num_hidden), jnp.float32, -bound1, bound1)
    bound2 = 1.0 / jnp.sqrt(float(num_hidden))
    w2 = jax.random.uniform(k3, (num_hidden, 1), jnp.float32, -bound2, bound2)
    b2 = jax.random.uniform(k4, (1, 1), jnp.float32, -bound2, bound2)
    return w1, b1, w2, b2


def _ref(x, w1, b1, w2, b2):
    return jnp.maximum(x @ w1 + b1, 0.0) @ w2 + b2


if __name__ == "__main__":
    key = jax.random.PRNGKey(0)
    k_x, k_x2, k_x3, k_p = jax.random.split(key, 4)

    num_hidden = 128
    w1, b1, w2, b2 = init_params(k_p, num_hidden)

    # Small example (single grid step, padded to one 128-lane tile).
    batch = 8
    x = jax.random.normal(k_x, (batch, 4), jnp.float32)
    out = value_network(x, w1, b1, w2, b2)
    jax.block_until_ready(out)
    assert out.shape == (batch, 1)
    assert jnp.allclose(out, _ref(x, w1, b1, w2, b2), atol=1e-4, rtol=1e-4)

    # Multi-tile check: several grid steps over the batch/lane axis.
    batch2 = 384
    x2 = jax.random.normal(k_x2, (batch2, 4), jnp.float32)
    out2 = value_network(x2, w1, b1, w2, b2, block_b=128)
    jax.block_until_ready(out2)
    assert out2.shape == (batch2, 1)
    assert jnp.allclose(out2, _ref(x2, w1, b1, w2, b2), atol=1e-4, rtol=1e-4)

    # Ragged-last-block check: B_pad=384 not a multiple of TB=256 (masked partial write).
    batch3 = 300
    x3 = jax.random.normal(k_x3, (batch3, 4), jnp.float32)
    out3 = value_network(x3, w1, b1, w2, b2, block_b=256)
    jax.block_until_ready(out3)
    assert out3.shape == (batch3, 1)
    assert jnp.allclose(out3, _ref(x3, w1, b1, w2, b2), atol=1e-4, rtol=1e-4)

    print("KERNEL_OK")
</pallas_src>

<mosaic_0001>
module attributes {stable_mosaic.version = 11 : i64} {
  func.func @value_network_kernel(%arg0: i32, %arg1: memref<5x128xf32, #tpu.memory_space<vmem>>, %arg2: memref<128x5xf32, #tpu.memory_space<vmem>>, %arg3: memref<1x128xf32, #tpu.memory_space<vmem>>, %arg4: memref<1x1xf32, #tpu.memory_space<smem>>, %arg5: memref<1x128xf32, #tpu.memory_space<vmem>>) attributes {dimension_semantics = [#tpu.dimension_semantics<parallel>], iteration_bounds = array<i64: 1>, scalar_prefetch = 0 : i64, scratch_operands = 0 : i64, tpu.core_type = #tpu.core_type<tc>, window_params = [{transform_indices = @transform_0, window_bounds = array<i64: 5, 128>}, {pipeline_mode = #tpu.pipeline_mode<synchronous>, transform_indices = @transform_1, window_bounds = array<i64: 128, 5>}, {pipeline_mode = #tpu.pipeline_mode<synchronous>, transform_indices = @transform_2, window_bounds = array<i64: 1, 128>}, {transform_indices = @transform_3, window_bounds = array<i64: 1, 1>}, {transform_indices = @transform_4, window_bounds = array<i64: 1, 128>}]} {
    %c0 = arith.constant 0 : index
    %c0_0 = arith.constant 0 : index
    %0 = vector.load %arg2[%c0, %c0_0] : memref<128x5xf32, #tpu.memory_space<vmem>>, vector<128x5xf32>
    %c0_1 = arith.constant 0 : index
    %c0_2 = arith.constant 0 : index
    %1 = vector.load %arg1[%c0_1, %c0_2] : memref<5x128xf32, #tpu.memory_space<vmem>>, vector<5x128xf32>
    %cst = arith.constant dense<0.000000e+00> : vector<128x128xf32>
    %2 = tpu.matmul %0, %1, %cst {dimension_numbers = #tpu.dot_dimension_numbers<[1], [0], [0], [1], [0, 0, 1, 1], [], []>} : vector<128x5xf32>, vector<5x128xf32>, vector<128x128xf32> -> vector<128x128xf32>
    %cst_3 = arith.constant 0.000000e+00 : f32
    %3 = vector.broadcast %cst_3 : f32 to vector<128x128xf32>
    %4 = arith.maximumf %2, %3 : vector<128x128xf32>
    %c0_4 = arith.constant 0 : index
    %c0_5 = arith.constant 0 : index
    %5 = vector.load %arg3[%c0_4, %c0_5] : memref<1x128xf32, #tpu.memory_space<vmem>>, vector<1x128xf32>
    %cst_6 = arith.constant dense<0.000000e+00> : vector<1x128xf32>
    %6 = tpu.matmul %5, %4, %cst_6 {dimension_numbers = #tpu.dot_dimension_numbers<[1], [0], [0], [1], [0, 0, 1, 1], [], []>} : vector<1x128xf32>, vector<128x128xf32>, vector<1x128xf32> -> vector<1x128xf32>
    %c0_7 = arith.constant 0 : index
    %c0_8 = arith.constant 0 : index
    %7 = memref.load %arg4[%c0_7, %c0_8] : memref<1x1xf32, #tpu.memory_space<smem>>
    %8 = vector.broadcast %7 : f32 to vector<1x128xf32>
    %9 = arith.addf %6, %8 : vector<1x128xf32>
    %c0_9 = arith.constant 0 : index
    %c0_10 = arith.constant 0 : index
    %10 = vector.load %arg5[%c0_9, %c0_10] : memref<1x128xf32, #tpu.memory_space<vmem>>, vector<1x128xf32>
    tpu.vector_store %arg5[%c0_9, %c0_10], %9 {strides = array<i32>} : memref<1x128xf32, #tpu.memory_space<vmem>>, vector<1x128xf32>,
    return
  }
  func.func @transform_0(%arg0: i32) -> (i32, i32) {
    %c0_i32 = arith.constant 0 : i32
    %c0_i32_0 = arith.constant 0 : i32
    return %c0_i32, %arg0 : i32, i32
  }
  func.func @transform_1(%arg0: i32) -> (i32, i32) {
    %c0_i32 = arith.constant 0 : i32
    %c0_i32_0 = arith.constant 0 : i32
    %c0_i32_1 = arith.constant 0 : i32
    return %c0_i32, %c0_i32_0 : i32, i32
  }
  func.func @transform_2(%arg0: i32) -> (i32, i32) {
    %c0_i32 = arith.constant 0 : i32
    %c0_i32_0 = arith.constant 0 : i32
    %c0_i32_1 = arith.constant 0 : i32
    return %c0_i32, %c0_i32_0 : i32, i32
  }
  func.func @transform_3(%arg0: i32) -> (i32, i32) {
    %c0_i32 = arith.constant 0 : i32
    %c0_i32_0 = arith.constant 0 : i32
    %c0_i32_1 = arith.constant 0 : i32
    return %c0_i32, %c0_i32_0 : i32, i32
  }
  func.func @transform_4(%arg0: i32) -> (i32, i32) {
    %c0_i32 = arith.constant 0 : i32
    %c0_i32_0 = arith.constant 0 : i32
    return %c0_i32, %arg0 : i32, i32
  }
}

</mosaic_0001>

<llo_original>
// kernel: value_network.1
$region0: #{value_network.1}
  #allocation0 [shape = 'u32[]', space=smem, size = 0x4, offset = 0x4, fixed_abs, tag = 'smem constant byte address 0x4 - core index']
  #allocation1 [shape = 'u32[144,128]{1,0:T(1,128)}', space=vmem, size = 0x12000, scoped, tag = 'internal scratch']
  #allocation2 [shape = 'f32[1,1]{1,0:T(1,128)S(6)}', space=smem, size = 0x200, scoped, tag = 'scoped memory for value_network.1']
  %s0 = inlined_call_operand.vmem [shape: f32[5,128], index: 0, kind: input, shape index: {}]
  %s1 = inlined_call_operand.vmem [shape: f32[128,5], index: 1, kind: input, shape index: {}]
  %s2 = inlined_call_operand.vmem [shape: f32[1,128], index: 2, kind: input, shape index: {}]
  %s3 = inlined_call_operand.<no memory space> [shape: f32[1,1], index: 3, kind: input, shape index: {}]
  %s4 = inlined_call_operand.vmem [shape: f32[1,128], index: 4, kind: output, shape index: {}]
  %s5 = sld [smem:[#allocation0]]
  $region26: #{value_network.1} parent=0
    _
  %s7 = ssub.s32 1, %s5
  %s8 = scalar_select 0, %s7, %s5
  %9 = sst [smem:[#allocation2]] %s3
  // Predicated region
  $region2: #{value_network.1} parent=0 // pred_check
    _
  $region3: #{value_network.1} parent=0 // pred_check_branch
    %11 = sbr.rel (0) target = $region5
  $region4: #{value_network.1} parent=0 // pred_region
    _
  $region5: #{value_network.1} parent=0 // pred_fallthru
    _
  // Predicated region
  $region6: #{value_network.1} parent=0 // pred_check
    _
  $region7: #{value_network.1} parent=0 // pred_check_branch
    %13 = sbr.rel (0) target = $region9
  $region8: #{value_network.1} parent=0 // pred_region
    _
  $region9: #{value_network.1} parent=0 // pred_fallthru
    _
  // Predicated region
  $region10: #{value_network.1} parent=0 // pred_check
    _
  $region11: #{value_network.1} parent=0 // pred_check_branch
    %15 = sbr.rel (0) target = $region13
  $region12: #{value_network.1} parent=0 // pred_region
    _
  $region13: #{value_network.1} parent=0 // pred_fallthru
    _
  // Predicated region
  $region14: #{value_network.1} parent=0 // pred_check
    _
  $region15: #{value_network.1} parent=0 // pred_check_branch
    %17 = sbr.rel (0) target = $region17
  $region16: #{value_network.1} parent=0 // pred_region
    _
  $region17: #{value_network.1} parent=0 // pred_fallthru
    _
  %v18 = vld [vmem:[%s1] sm:$0xff]
  %v19 = vld [vmem:[%s1 + $0x8] sm:$0xff]
  %v20 = vld [vmem:[%s1 + $0x10] sm:$0xff]
  %v21 = vld [vmem:[%s1 + $0x18] sm:$0xff]
  %v22 = vld [vmem:[%s1 + $0x20] sm:$0xff]
  %v23 = vld [vmem:[%s1 + $0x28] sm:$0xff]
  %v24 = vld [vmem:[%s1 + $0x30] sm:$0xff]
  %v25 = vld [vmem:[%s1 + $0x38] sm:$0xff]
  %v26 = vld [vmem:[%s1 + $0x40] sm:$0xff]
  %v27 = vld [vmem:[%s1 + $0x48] sm:$0xff]
  %v28 = vld [vmem:[%s1 + $0x50] sm:$0xff]
  %v29 = vld [vmem:[%s1 + $0x58] sm:$0xff]
  %v30 = vld [vmem:[%s1 + $0x60] sm:$0xff]
  %v31 = vld [vmem:[%s1 + $0x68] sm:$0xff]
  %v32 = vld [vmem:[%s1 + $0x70] sm:$0xff]
  %v33 = vld [vmem:[%s1 + $0x78] sm:$0xff]
  %v34 = vld [vmem:[%s0] sm:$0x1f]
  %vm35 = vcmask 39936
  %v37 = vsel %vm35, %v18, 0
  %v40 = vsel %vm35, %v19, 0
  %v43 = vsel %vm35, %v20, 0
  %v46 = vsel %vm35, %v21, 0
  %v49 = vsel %vm35, %v22, 0
  %v52 = vsel %vm35, %v23, 0
  %v55 = vsel %vm35, %v24, 0
  %v58 = vsel %vm35, %v25, 0
  %v61 = vsel %vm35, %v26, 0
  %v64 = vsel %vm35, %v27, 0
  %v67 = vsel %vm35, %v28, 0
  %v70 = vsel %vm35, %v29, 0
  %v73 = vsel %vm35, %v30, 0
  %v76 = vsel %vm35, %v31, 0
  %v79 = vsel %vm35, %v32, 0
  %v82 = vsel %vm35, %v33, 0
  %vm84 = vcmask 1044480
  %v86 = vsel %vm84, %v34, 0
  %88 = vmatprep.subr.mxu0 0.0
  %89 = vmatpush1.msra.mxu0 %v86
  %90 = vmatprep.subr.mxu0 0.0
  %91 = vmatpush1.msra.mxu0 0.0
  %92 = vmatprep.subr.mxu0 0.0
  %93 = vmatpush1.msra.mxu0 0.0
  %94 = vmatprep.subr.mxu0 0.0
  %95 = vmatpush1.msra.mxu0 0.0
  %96 = vmatprep.subr.mxu0 0.0
  %97 = vmatpush1.msra.mxu0 0.0
  %98 = vmatprep.subr.mxu0 0.0
  %99 = vmatpush1.msra.mxu0 0.0
  %100 = vmatprep.subr.mxu0 0.0
  %101 = vmatpush1.msra.mxu0 0.0
  %102 = vmatprep.subr.mxu0 0.0
  %103 = vmatpush1.msra.mxu0 0.0
  %104 = vmatprep.subr.mxu0 0.0
  %105 = vmatpush1.msra.mxu0 0.0
  %106 = vmatprep.subr.mxu0 0.0
  %107 = vmatpush1.msra.mxu0 0.0
  %108 = vmatprep.subr.mxu0 0.0
  %109 = vmatpush1.msra.mxu0 0.0
  %110 = vmatprep.subr.mxu0 0.0
  %111 = vmatpush1.msra.mxu0 0.0
  %112 = vmatprep.subr.mxu0 0.0
  %113 = vmatpush1.msra.mxu0 0.0
  %114 = vmatprep.subr.mxu0 0.0
  %115 = vmatpush1.msra.mxu0 0.0
  %116 = vmatprep.subr.mxu0 0.0
  %117 = vmatpush1.msra.mxu0 0.0
  %118 = vmatprep.subr.mxu0 0.0
  %119 = vmatpush1.msra.mxu0 0.0
  %120 = vmatprep.subr.mxu0 0.0
  %121 = vmatpush1.msra.mxu0 0.0
  %122 = vmatprep.subr.mxu0 0.0
  %123 = vmatpush1.msra.mxu0 0.0
  %124 = vmatprep.subr.mxu0 0.0
  %125 = vmatpush1.msra.mxu0 0.0
  %126 = vmatprep.subr.mxu0 0.0
  %127 = vmatpush1.msra.mxu0 0.0
  %128 = vmatprep.subr.mxu0 0.0
  %129 = vmatpush1.msra.mxu0 0.0
  %130 = vmatprep.subr.mxu0 0.0
  %131 = vmatpush1.msra.mxu0 0.0
  %132 = vmatprep.subr.mxu0 0.0
  %133 = vmatpush1.msra.mxu0 0.0
  %134 = vmatprep.subr.mxu0 0.0
  %135 = vmatpush1.msra.mxu0 0.0
  %136 = vmatprep.subr.mxu0 0.0
  %137 = vmatpush1.msra.mxu0 0.0
  %138 = vmatprep.subr.mxu0 0.0
  %139 = vmatpush1.msra.mxu0 0.0
  %140 = vmatprep.subr.mxu0 0.0
  %141 = vmatpush1.msra.mxu0 0.0
  %142 = vmatprep.subr.mxu0 0.0
  %143 = vmatpush1.msra.mxu0 0.0
  %144 = vmatprep.subr.mxu0 0.0
  %145 = vmatpush1.msra.mxu0 0.0
  %146 = vmatprep.subr.mxu0 0.0
  %147 = vmatpush1.msra.mxu0 0.0
  %148 = vmatprep.subr.mxu0 0.0
  %149 = vmatpush1.msra.mxu0 0.0
  %150 = vmatprep.subr.mxu0 0.0
  %151 = vmatpush1.msra.mxu0 0.0
  %152 = vmatprep.mubr.f32.mxu0 0.0
  %153 = vmatmul.mubr.f32.gmra.mrb[0].mxu0 %v37
  %v154 = vpop.f32.mrb[0].mxu0
  %v155 = vadd.f32 0.0, %v154
  %v156 = vpop.f32.mrb[0].mxu0
  %157 = vmatprep.mubr.f32.mxu0 0.0
  %158 = vmatmul.mubr.f32.gmra.mrb[0].mxu0 %v40
  %v159 = vpop.f32.mrb[0].mxu0
  %v160 = vadd.f32 0.0, %v159
  %v161 = vpop.f32.mrb[0].mxu0
  %162 = vmatprep.mubr.f32.mxu0 0.0
  %163 = vmatmul.mubr.f32.gmra.mrb[0].mxu0 %v43
  %v164 = vpop.f32.mrb[0].mxu0
  %v165 = vadd.f32 0.0, %v164
  %v166 = vpop.f32.mrb[0].mxu0
  %167 = vmatprep.mubr.f32.mxu0 0.0
  %168 = vmatmul.mubr.f32.gmra.mrb[0].mxu0 %v46
  %v169 = vpop.f32.mrb[0].mxu0
  %v170 = vadd.f32 0.0, %v169
  %v171 = vpop.f32.mrb[0].mxu0
  %172 = vmatprep.mubr.f32.mxu0 0.0
  %173 = vmatmul.mubr.f32.gmra.mrb[0].mxu0 %v49
  %v174 = vpop.f32.mrb[0].mxu0
  %v175 = vadd.f32 0.0, %v174
  %v176 = vpop.f32.mrb[0].mxu0
  %177 = vmatprep.mubr.f32.mxu0 0.0
  %178 = vmatmul.mubr.f32.gmra.mrb[0].mxu0 %v52
  %v179 = vpop.f32.mrb[0].mxu0
  %v180 = vadd.f32 0.0, %v179
  %v181 = vpop.f32.mrb[0].mxu0
  %182 = vmatprep.mubr.f32.mxu0 0.0
  %183 = vmatmul.mubr.f32.gmra.mrb[0].mxu0 %v55
  %v184 = vpop.f32.mrb[0].mxu0
  %v185 = vadd.f32 0.0, %v184
  %v186 = vpop.f32.mrb[0].mxu0
  %187 = vmatprep.mubr.f32.mxu0 0.0
  %188 = vmatmul.mubr.f32.gmra.mrb[0].mxu0 %v58
  %v189 = vpop.f32.mrb[0].mxu0
  %v190 = vadd.f32 0.0, %v189
  %v191 = vpop.f32.mrb[0].mxu0
  %192 = vmatprep.mubr.f32.mxu0 0.0
  %193 = vmatmul.mubr.f32.gmra.mrb[0].mxu0 %v61
  %v194 = vpop.f32.mrb[0].mxu0
  %v195 = vadd.f32 0.0, %v194
  %v196 = vpop.f32.mrb[0].mxu0
  %197 = vmatprep.mubr.f32.mxu0 0.0
  %198 = vmatmul.mubr.f32.gmra.mrb[0].mxu0 %v64
  %v199 = vpop.f32.mrb[0].mxu0
  %v200 = vadd.f32 0.0, %v199
  %v201 = vpop.f32.mrb[0].mxu0
  %202 = vmatprep.mubr.f32.mxu0 0.0
  %203 = vmatmul.mubr.f32.gmra.mrb[0].mxu0 %v67
  %v204 = vpop.f32.mrb[0].mxu0
  %v205 = vadd.f32 0.0, %v204
  %v206 = vpop.f32.mrb[0].mxu0
  %207 = vmatprep.mubr.f32.mxu0 0.0
  %208 = vmatmul.mubr.f32.gmra.mrb[0].mxu0 %v70
  %v209 = vpop.f32.mrb[0].mxu0
  %v210 = vadd.f32 0.0, %v209
  %v211 = vpop.f32.mrb[0].mxu0
  %212 = vmatprep.mubr.f32.mxu0 0.0
  %213 = vmatmul.mubr.f32.gmra.mrb[0].mxu0 %v73
  %v214 = vpop.f32.mrb[0].mxu0
  %v215 = vadd.f32 0.0, %v214
  %v216 = vpop.f32.mrb[0].mxu0
  %217 = vmatprep.mubr.f32.mxu0 0.0
  %218 = vmatmul.mubr.f32.gmra.mrb[0].mxu0 %v76
  %v219 = vpop.f32.mrb[0].mxu0
  %v220 = vadd.f32 0.0, %v219
  %v221 = vpop.f32.mrb[0].mxu0
  %222 = vmatprep.mubr.f32.mxu0 0.0
  %223 = vmatmul.mubr.f32.gmra.mrb[0].mxu0 %v79
  %v224 = vpop.f32.mrb[0].mxu0
  %v225 = vadd.f32 0.0, %v224
  %v226 = vpop.f32.mrb[0].mxu0
  %227 = vmatprep.mubr.f32.mxu0 0.0
  %228 = vmatmul.mubr.f32.gmra.mrb[0].mxu0 %v82
  %v229 = vpop.f32.mrb[0].mxu0
  %v230 = vadd.f32 0.0, %v229
  %v231 = vpop.f32.mrb[0].mxu0
  %232 = vdwg.mxu0
  %v233 = vmax.f32 %v155, 0.0
  %v234 = vmax.f32 %v160, 0.0
  %v235 = vmax.f32 %v165, 0.0
  %v236 = vmax.f32 %v170, 0.0
  %v237 = vmax.f32 %v175, 0.0
  %v238 = vmax.f32 %v180, 0.0
  %v239 = vmax.f32 %v185, 0.0
  %v240 = vmax.f32 %v190, 0.0
  %v241 = vmax.f32 %v195, 0.0
  %v242 = vmax.f32 %v200, 0.0
  %v243 = vmax.f32 %v205, 0.0
  %v244 = vmax.f32 %v210, 0.0
  %v245 = vmax.f32 %v215, 0.0
  %v246 = vmax.f32 %v220, 0.0
  %v247 = vmax.f32 %v225, 0.0
  %v248 = vmax.f32 %v230, 0.0
  %v249 = vld [vmem:[%s2] sm:$0x1]
  %s250 = sld [smem:[#allocation2]]
  %v251 = vstv %s250
  %252 = vmatprep.subr.mxu0 0.0
  %253 = vmatpush1.msra.mxu0 %v233
  %254 = vmatprep.subr.mxu0 0.0
  %255 = vmatpush1.msra.mxu0 %v234
  %256 = vmatprep.subr.mxu0 0.0
  %257 = vmatpush1.msra.mxu0 %v235
  %258 = vmatprep.subr.mxu0 0.0
  %259 = vmatpush1.msra.mxu0 %v236
  %260 = vmatprep.subr.mxu0 0.0
  %261 = vmatpush1.msra.mxu0 %v237
  %262 = vmatprep.subr.mxu0 0.0
  %263 = vmatpush1.msra.mxu0 %v238
  %264 = vmatprep.subr.mxu0 0.0
  %265 = vmatpush1.msra.mxu0 %v239
  %266 = vmatprep.subr.mxu0 0.0
  %267 = vmatpush1.msra.mxu0 %v240
  %268 = vmatprep.subr.mxu0 0.0
  %269 = vmatpush1.msra.mxu0 %v241
  %270 = vmatprep.subr.mxu0 0.0
  %271 = vmatpush1.msra.mxu0 %v242
  %272 = vmatprep.subr.mxu0 0.0
  %273 = vmatpush1.msra.mxu0 %v243
  %274 = vmatprep.subr.mxu0 0.0
  %275 = vmatpush1.msra.mxu0 %v244
  %276 = vmatprep.subr.mxu0 0.0
  %277 = vmatpush1.msra.mxu0 %v245
  %278 = vmatprep.subr.mxu0 0.0
  %279 = vmatpush1.msra.mxu0 %v246
  %280 = vmatprep.subr.mxu0 0.0
  %281 = vmatpush1.msra.mxu0 %v247
  %282 = vmatprep.subr.mxu0 0.0
  %283 = vmatpush1.msra.mxu0 %v248
  %284 = vmatprep.subr.mxu0 0.0
  %285 = vmatpush1.msra.mxu0 0.0
  %286 = vmatprep.subr.mxu0 0.0
  %287 = vmatpush1.msra.mxu0 0.0
  %288 = vmatprep.subr.mxu0 0.0
  %289 = vmatpush1.msra.mxu0 0.0
  %290 = vmatprep.subr.mxu0 0.0
  %291 = vmatpush1.msra.mxu0 0.0
  %292 = vmatprep.subr.mxu0 0.0
  %293 = vmatpush1.msra.mxu0 0.0
  %294 = vmatprep.subr.mxu0 0.0
  %295 = vmatpush1.msra.mxu0 0.0
  %296 = vmatprep.subr.mxu0 0.0
  %297 = vmatpush1.msra.mxu0 0.0
  %298 = vmatprep.subr.mxu0 0.0
  %299 = vmatpush1.msra.mxu0 0.0
  %300 = vmatprep.subr.mxu0 0.0
  %301 = vmatpush1.msra.mxu0 0.0
  %302 = vmatprep.subr.mxu0 0.0
  %303 = vmatpush1.msra.mxu0 0.0
  %304 = vmatprep.subr.mxu0 0.0
  %305 = vmatpush1.msra.mxu0 0.0
  %306 = vmatprep.subr.mxu0 0.0
  %307 = vmatpush1.msra.mxu0 0.0
  %308 = vmatprep.subr.mxu0 0.0
  %309 = vmatpush1.msra.mxu0 0.0
  %310 = vmatprep.subr.mxu0 0.0
  %311 = vmatpush1.msra.mxu0 0.0
  %312 = vmatprep.subr.mxu0 0.0
  %313 = vmatpush1.msra.mxu0 0.0
  %314 = vmatprep.subr.mxu0 0.0
  %315 = vmatpush1.msra.mxu0 0.0
  %316 = vmatprep.mubr.f32.mxu0 0.0
  %317 = vmatmul.mubr.f32.gmra.mrb[0].mxu0 %v249
  %v318 = vpop.f32.mrb[0].mxu0
  %v319 = vadd.f32 %v251, %v318
  %v320 = vpop.f32.mrb[0].mxu0
  %321 = vdwg.mxu0
  %322 = vst [vmem:[%s4] sm:$0x1] %v319
  // Predicated region
  $region18: #{value_network.1} parent=0 // pred_check
    _
  $region19: #{value_network.1} parent=0 // pred_check_branch
    %324 = sbr.rel (0) target = $region21
  $region20: #{value_network.1} parent=0 // pred_region
    _
  $region21: #{value_network.1} parent=0 // pred_fallthru
    _
  // Predicated region
  $region22: #{value_network.1} parent=0 // pred_check
    _
  $region23: #{value_network.1} parent=0 // pred_check_branch
    %326 = sbr.rel (0) target = $region25
  $region24: #{value_network.1} parent=0 // pred_region
    _
  $region25: #{value_network.1} parent=0 // pred_fallthru
    _

</llo_original>
